<compile_context>
chip_gen: v7x
topology: tpu7x:2x2x1
jax: 0.10.0
libtpu: 0.0.40
codegen_flags: <defaults>
</compile_context>

<pallas_src>
import jax
import jax.numpy as jnp
from jax.experimental import pallas as pl
from jax.experimental.pallas import tpu as pltpu

P_DROP = 0.6
SCALE = 1.0 / (1.0 - P_DROP)
# keep element  <=>  uint32 random bits >= round(p * 2^32)   (keep prob = 1 - p)
KEEP_THRESH = int(round(P_DROP * 2.0**32))


def dropout_matmul_kernel(x_ref, r_ref, w_ref, o_ref, acc_ref):
    # grid = (i over M tiles, j over N tiles, k over K tiles); k is innermost.
    k = pl.program_id(2)

    @pl.when(k == 0)
    def _init():
        acc_ref[...] = jnp.zeros_like(acc_ref)

    # Inverted dropout via integer threshold compare (cheap VPU filler under MXU).
    keep = r_ref[...] >= jnp.uint32(KEEP_THRESH)
    s1 = jnp.where(keep, x_ref[...] * jnp.float32(SCALE), jnp.float32(0.0))

    # NOTE: torch.rand_like(s1) + second dropout (c2) in the reference module is
    # dead code (result unused), intentionally omitted.

    # bf16 MXU inputs, f32 accumulation.
    acc_ref[...] += jnp.dot(
        s1.astype(jnp.bfloat16),
        w_ref[...].astype(jnp.bfloat16),
        preferred_element_type=jnp.float32,
    )

    @pl.when(k == pl.num_programs(2) - 1)
    def _finalize():
        o_ref[...] = acc_ref[...].astype(o_ref.dtype)


def _pick_tile(dim, candidates):
    for c in candidates:
        if c <= dim and dim % c == 0:
            return c
    return dim  # fall back to full extent (always legal for BlockSpec)


def model_forward(x, w, seed=0, *, tm=None, tn=None, tk=None):
    """x: [M, K] f32, w: [K, N] f32 -> [M, N] f32 (dropout(x, 0.6) @ w)."""
    M, K = x.shape
    K2, N = w.shape
    assert K == K2, (x.shape, w.shape)

    tm = tm or _pick_tile(M, (128, 256, 64, 32, 16, 8))
    tn = tn or _pick_tile(N, (256, 512, 128))
    tk = tk or _pick_tile(K, (256, 512, 128))
    assert M % tm == 0 and N % tn == 0 and K % tk == 0

    # Dropout random bits, generated once; tiled along (i, k) exactly like x so
    # the mask is identical for every output-column tile j.
    rbits = jax.random.bits(jax.random.PRNGKey(seed), (M, K), dtype=jnp.uint32)

    grid = (M // tm, N // tn, K // tk)

    cost = pl.CostEstimate(
        flops=2 * M * N * K,
        transcendentals=0,
        bytes_accessed=4 * (M * K + K * N + M * N) + 4 * M * K,  # + rbits
    )

    return pl.pallas_call(
        dropout_matmul_kernel,
        out_shape=jax.ShapeDtypeStruct((M, N), jnp.float32),
        grid=grid,
        in_specs=[
            pl.BlockSpec((tm, tk), lambda i, j, k: (i, k)),  # x block
            pl.BlockSpec((tm, tk), lambda i, j, k: (i, k)),  # dropout bits block
            pl.BlockSpec((tk, tn), lambda i, j, k: (k, j)),  # shape2 block
        ],
        out_specs=pl.BlockSpec((tm, tn), lambda i, j, k: (i, j)),
        scratch_shapes=[pltpu.VMEM((tm, tn), jnp.float32)],
        compiler_params=pltpu.CompilerParams(
            dimension_semantics=("parallel", "parallel", "arbitrary"),
            vmem_limit_bytes=32 * 1024 * 1024,
        ),
        cost_estimate=cost,
    )(x, rbits, w)


if __name__ == "__main__":
    # Small, tile-friendly 2-D matmul shapes implied by the module:
    #   input:  [M, K] = [256, 512]
    #   shape2: [K, N] = [512, 512]
    M, K, N = 256, 512, 512
    key = jax.random.PRNGKey(0)
    kx, kw = jax.random.split(key)
    x = jax.random.normal(kx, (M, K), dtype=jnp.float32)
    w = jax.random.normal(kw, (K, N), dtype=jnp.float32)

    out = jax.block_until_ready(model_forward(x, w, seed=0))

    # Reference computed the same way (same mask, same bf16 MXU inputs, f32 acc).
    rbits = jax.random.bits(jax.random.PRNGKey(0), (M, K), dtype=jnp.uint32)
    keep = rbits >= jnp.uint32(KEEP_THRESH)
    s1 = jnp.where(keep, x * jnp.float32(SCALE), jnp.float32(0.0))
    ref = jnp.dot(
        s1.astype(jnp.bfloat16), w.astype(jnp.bfloat16),
        preferred_element_type=jnp.float32,
    )

    assert out.shape == (M, N) and out.dtype == jnp.float32
    assert jnp.allclose(out, ref, rtol=1e-2, atol=1e-2), float(
        jnp.max(jnp.abs(out - ref))
    )
    print("KERNEL_OK")
</pallas_src>

<mosaic_0001>
module attributes {stable_mosaic.version = 11 : i64} {
  func.func @dropout_matmul_kernel(%arg0: i32, %arg1: i32, %arg2: i32, %arg3: memref<128x256xf32, #tpu.memory_space<vmem>>, %arg4: memref<128x256xi32, #tpu.memory_space<vmem>>, %arg5: memref<256x256xf32, #tpu.memory_space<vmem>>, %arg6: memref<128x256xf32, #tpu.memory_space<vmem>>, %arg7: memref<128x256xf32, #tpu.memory_space<vmem>>) attributes {dimension_semantics = [#tpu.dimension_semantics<parallel>, #tpu.dimension_semantics<parallel>, #tpu.dimension_semantics<arbitrary>], iteration_bounds = array<i64: 2, 2, 2>, scalar_prefetch = 0 : i64, scratch_operands = 1 : i64, tpu.core_type = #tpu.core_type<tc>, window_params = [{transform_indices = @transform_0, window_bounds = array<i64: 128, 256>}, {transform_indices = @transform_1, window_bounds = array<i64: 128, 256>}, {transform_indices = @transform_2, window_bounds = array<i64: 256, 256>}, {transform_indices = @transform_3, window_bounds = array<i64: 128, 256>}]} {
    %c0_i32 = arith.constant 0 : i32
    %0 = arith.cmpi eq, %arg2, %c0_i32 : i32
    %1 = arith.extui %0 : i1 to i32
    %c0_i32_0 = arith.constant 0 : i32
    %2 = arith.cmpi ne, %1, %c0_i32_0 : i32
    scf.if %2 {
      %cst_13 = arith.constant 0.000000e+00 : f32
      %21 = vector.broadcast %cst_13 : f32 to vector<128x256xf32>
      %c0_14 = arith.constant 0 : index
      %c0_15 = arith.constant 0 : index
      %22 = vector.load %arg7[%c0_14, %c0_15] : memref<128x256xf32, #tpu.memory_space<vmem>>, vector<128x256xf32>
      tpu.vector_store %arg7[%c0_14, %c0_15], %21 {strides = array<i32>} : memref<128x256xf32, #tpu.memory_space<vmem>>, vector<128x256xf32>,
    } else {
    }
    %c0 = arith.constant 0 : index
    %c0_1 = arith.constant 0 : index
    %3 = vector.load %arg4[%c0, %c0_1] : memref<128x256xi32, #tpu.memory_space<vmem>>, vector<128x256xi32>
    %c-1717986918_i32 = arith.constant -1717986918 : i32
    %4 = vector.broadcast %c-1717986918_i32 : i32 to vector<128x256xi32>
    %5 = arith.cmpi uge, %3, %4 : vector<128x256xi32>
    %c0_2 = arith.constant 0 : index
    %c0_3 = arith.constant 0 : index
    %6 = vector.load %arg3[%c0_2, %c0_3] : memref<128x256xf32, #tpu.memory_space<vmem>>, vector<128x256xf32>
    %cst = arith.constant 2.500000e+00 : f32
    %7 = vector.broadcast %cst : f32 to vector<128x256xf32>
    %8 = arith.mulf %6, %7 : vector<128x256xf32>
    %cst_4 = arith.constant 0.000000e+00 : f32
    %9 = vector.broadcast %cst_4 : f32 to vector<128x256xf32>
    %10 = arith.select %5, %8, %9 : vector<128x256xi1>, vector<128x256xf32>
    %c0_5 = arith.constant 0 : index
    %c0_6 = arith.constant 0 : index
    %11 = vector.load %arg7[%c0_5, %c0_6] : memref<128x256xf32, #tpu.memory_space<vmem>>, vector<128x256xf32>
    %12 = arith.truncf %10 : vector<128x256xf32> to vector<128x256xbf16>
    %c0_7 = arith.constant 0 : index
    %c0_8 = arith.constant 0 : index
    %13 = vector.load %arg5[%c0_7, %c0_8] : memref<256x256xf32, #tpu.memory_space<vmem>>, vector<256x256xf32>
    %14 = arith.truncf %13 : vector<256x256xf32> to vector<256x256xbf16>
    %cst_9 = arith.constant dense<0.000000e+00> : vector<128x256xf32>
    %15 = tpu.matmul %12, %14, %cst_9 {dimension_numbers = #tpu.dot_dimension_numbers<[1], [0], [0], [1], [0, 0, 1, 1], [], []>} : vector<128x256xbf16>, vector<256x256xbf16>, vector<128x256xf32> -> vector<128x256xf32>
    %16 = arith.addf %11, %15 : vector<128x256xf32>
    %c0_10 = arith.constant 0 : index
    %c0_11 = arith.constant 0 : index
    %17 = vector.load %arg7[%c0_10, %c0_11] : memref<128x256xf32, #tpu.memory_space<vmem>>, vector<128x256xf32>
    tpu.vector_store %arg7[%c0_10, %c0_11], %16 {strides = array<i32>} : memref<128x256xf32, #tpu.memory_space<vmem>>, vector<128x256xf32>,
    %c1_i32 = arith.constant 1 : i32
    %18 = arith.cmpi eq, %arg2, %c1_i32 : i32
    %19 = arith.extui %18 : i1 to i32
    %c0_i32_12 = arith.constant 0 : i32
    %20 = arith.cmpi ne, %19, %c0_i32_12 : i32
    scf.if %20 {
      %c0_13 = arith.constant 0 : index
      %c0_14 = arith.constant 0 : index
      %21 = vector.load %arg7[%c0_13, %c0_14] : memref<128x256xf32, #tpu.memory_space<vmem>>, vector<128x256xf32>
      %c0_15 = arith.constant 0 : index
      %c0_16 = arith.constant 0 : index
      %22 = vector.load %arg6[%c0_15, %c0_16] : memref<128x256xf32, #tpu.memory_space<vmem>>, vector<128x256xf32>
      tpu.vector_store %arg6[%c0_15, %c0_16], %21 {strides = array<i32>} : memref<128x256xf32, #tpu.memory_space<vmem>>, vector<128x256xf32>,
    } else {
    }
    return
  }
  func.func @transform_0(%arg0: i32, %arg1: i32, %arg2: i32) -> (i32, i32) {
    %c0_i32 = arith.constant 0 : i32
    return %arg0, %arg2 : i32, i32
  }
  func.func @transform_1(%arg0: i32, %arg1: i32, %arg2: i32) -> (i32, i32) {
    %c0_i32 = arith.constant 0 : i32
    return %arg0, %arg2 : i32, i32
  }
  func.func @transform_2(%arg0: i32, %arg1: i32, %arg2: i32) -> (i32, i32) {
    %c0_i32 = arith.constant 0 : i32
    return %arg2, %arg1 : i32, i32
  }
  func.func @transform_3(%arg0: i32, %arg1: i32, %arg2: i32) -> (i32, i32) {
    %c0_i32 = arith.constant 0 : i32
    return %arg0, %arg1 : i32, i32
  }
}

</mosaic_0001>

<llo_original>
// kernel: tpu_custom_call.1
$region0: #{tpu_custom_call.1}
  #allocation0 [shape = 'u32[]', space=smem, size = 0x4, offset = 0x4, fixed_abs, tag = 'smem constant byte address 0x4 - core index']
  #allocation1 [shape = 'u32[144,128]{1,0:T(1,128)}', space=vmem, size = 0x12000, scoped, tag = 'internal scratch']
  #allocation2 [shape = 'f32[128,256]{1,0:T(8,128)}', space=vmem, size = 0x20000, scoped, tag = 'scratch operand']
  %s0 = inlined_call_operand.hbm [shape: f32[256,512], index: 0, kind: input, shape index: {}]
  %s1 = inlined_call_operand.hbm [shape: u32[256,512], index: 1, kind: input, shape index: {}]
  %s2 = inlined_call_operand.hbm [shape: f32[512,512], index: 2, kind: input, shape index: {}]
  %s3 = inlined_call_operand.hbm [shape: f32[256,512], index: 3, kind: output, shape index: {}]
  %s4 = sld [smem:[#allocation0]]
  $region65: #{tpu_custom_call.1} parent=0
    _
  %s6 = ssub.s32 1, %s4
  %s7 = scalar_select 0, %s6, %s4
  $region1: #{tpu_custom_call.1} parent=0
    #allocation3 [shape = 'u8[262144]{0}', space=vmem, size = 0x40000, scoped, tag = 'input window, operand 0']
    #allocation4 [shape = 's32[2]{0}', space=sflag, size = 0x8, scoped, tag = 'scoped memory for tpu_custom_call.1']
    #allocation5 [shape = 's32[2]{0}', space=sflag, size = 0x8, scoped, tag = 'scoped memory for tpu_custom_call.1']
    #allocation6 [shape = 'u8[262144]{0}', space=vmem, size = 0x40000, scoped, tag = 'input window, operand 1']
    #allocation7 [shape = 's32[2]{0}', space=sflag, size = 0x8, scoped, tag = 'scoped memory for tpu_custom_call.1']
    #allocation8 [shape = 'u8[524288]{0}', space=vmem, size = 0x80000, scoped, tag = 'input window, operand 2']
    #allocation9 [shape = 'u8[262144]{0}', space=vmem, size = 0x40000, scoped, tag = 'output window, operand 0']
    %8 = vsyncpa [#allocation4], 0
    %s9 = scalar_lea.sflag [#allocation4], 1
    %10 = vsyncpa %s9, 0
    %11 = vsyncpa [#allocation7], 0
    %s12 = scalar_lea.sflag [#allocation7], 1
    %13 = vsyncpa %s12, 0
    %14 = vsyncpa [#allocation5], 0
    %s15 = scalar_lea.sflag [#allocation5], 1
    %16 = vsyncpa %s15, 0
    loop: start=0, step=1, limit=10
    $region2: #{tpu_custom_call.1} parent=1 // loop_pre_header
      _
    $region3: #{tpu_custom_call.1} parent=1 // loop_header
      %s18 = sphi 0, %s22
      %p19 = scmp.ge.s32.totalorder %s18, 10
      %s25 = sphi 0, %s44
      %s26 = sphi 0, %s40
      %s27 = sphi 0, %s36
      %s28 = sphi 0, %s25
      %s29 = sphi 0, %s26
      %s30 = sphi 0, %s27
      %s31 = sphi 0, %s28
      %s32 = sphi 0, %s29
      %s33 = sphi 0, %s30
      %s49 = sphi 0, %s51
      %s52 = sphi 0, %s49
      %s53 = sphi 0, %s52
      %s69 = sphi 0, %s53
      %s77 = sphi 0, %s79
      %s80 = sphi 0, %s77
      %s81 = sphi 0, %s80
      %s97 = sphi 0, %s81
      %s105 = sphi 0, %s107
      %s108 = sphi 0, %s105
      %s109 = sphi 0, %s108
      %s125 = sphi 0, %s109
      %s133 = sphi 0, %s135
      %s136 = sphi 0, %s133
      %s137 = sphi 0, %s136
      %s153 = sphi 0, %s137
    $region4: #{tpu_custom_call.1} parent=1 // loop_header_branch
      %21 = sbr.rel (%p19) target = $region8
    $region5: #{tpu_custom_call.1} parent=1 // loop_body
      %s23 = ssub.s32 %s18, 1
      %s24 = ssub.s32 %s18, 2
      %s34 = sadd.s32 1, %s27
      %p35 = scmp.ge.s32.totalorder %s34, 2
      %s36 = scalar_select %p35, 0, %s34
      %s37 = sadd.s32 1, %s26
      %s38 = scalar_select %p35, %s37, %s26
      %p39 = scmp.ge.s32.totalorder %s38, 2
      %s40 = scalar_select %p39, 0, %s38
      %s41 = sadd.s32 1, %s25
      %s42 = scalar_select %p39, %s41, %s25
      %p43 = scmp.ge.s32.totalorder %s42, 2
      %s44 = scalar_select %p43, 0, %s42
      %s45 = ssub.s32 %s25, %s44
      %s46 = ssub.s32 %s27, %s36
      %s47 = sor.u32 %s45, %s46
      %p48 = scmp.eq.s32.totalorder %s47, 0
      %s50 = sadd.s32 %s49, 1
      %s51 = scalar_select %p48, %s49, %s50
      %p54 = pneg %p48
      %p55 = scmp.eq.s32.totalorder %s18, 7
      %p56 = por %p54, %p55
      %p57 = scmp.ne.s32.totalorder %s49, %s52
      %p58 = scmp.eq.s32.totalorder %s18, 0
      %p59 = por %p57, %p58
      %p60 = scmp.ne.s32.totalorder %s49, %s52
      %p61 = scmp.eq.s32.totalorder %s23, 7
      %p62 = por %p60, %p61
      %p63 = scmp.ne.s32.totalorder %s52, %s53
      %p64 = scmp.eq.s32.totalorder %s23, 0
      %p65 = por %p63, %p64
      %p66 = scmp.ne.s32.totalorder %s52, %s53
      %p67 = scmp.eq.s32.totalorder %s24, 7
      %p68 = por %p66, %p67
      %p70 = scmp.ne.s32.totalorder %s53, %s69
      %p71 = scmp.eq.s32.totalorder %s24, 0
      %p72 = por %p70, %p71
      %s73 = ssub.s32 %s25, %s44
      %s74 = ssub.s32 %s27, %s36
      %s75 = sor.u32 %s73, %s74
      %p76 = scmp.eq.s32.totalorder %s75, 0
      %s78 = sadd.s32 %s77, 1
      %s79 = scalar_select %p76, %s77, %s78
      %p82 = pneg %p76
      %p83 = scmp.eq.s32.totalorder %s18, 7
      %p84 = por %p82, %p83
      %p85 = scmp.ne.s32.totalorder %s77, %s80
      %p86 = scmp.eq.s32.totalorder %s18, 0
      %p87 = por %p85, %p86
      %p88 = scmp.ne.s32.totalorder %s77, %s80
      %p89 = scmp.eq.s32.totalorder %s23, 7
      %p90 = por %p88, %p89
      %p91 = scmp.ne.s32.totalorder %s80, %s81
      %p92 = scmp.eq.s32.totalorder %s23, 0
      %p93 = por %p91, %p92
      %p94 = scmp.ne.s32.totalorder %s80, %s81
      %p95 = scmp.eq.s32.totalorder %s24, 7
      %p96 = por %p94, %p95
      %p98 = scmp.ne.s32.totalorder %s81, %s97
      %p99 = scmp.eq.s32.totalorder %s24, 0
      %p100 = por %p98, %p99
      %s101 = ssub.s32 %s27, %s36
      %s102 = ssub.s32 %s26, %s40
      %s103 = sor.u32 %s101, %s102
      %p104 = scmp.eq.s32.totalorder %s103, 0
      %s106 = sadd.s32 %s105, 1
      %s107 = scalar_select %p104, %s105, %s106
      %p110 = pneg %p104
      %p111 = scmp.eq.s32.totalorder %s18, 7
      %p112 = por %p110, %p111
      %p113 = scmp.ne.s32.totalorder %s105, %s108
      %p114 = scmp.eq.s32.totalorder %s18, 0
      %p115 = por %p113, %p114
      %p116 = scmp.ne.s32.totalorder %s105, %s108
      %p117 = scmp.eq.s32.totalorder %s23, 7
      %p118 = por %p116, %p117
      %p119 = scmp.ne.s32.totalorder %s108, %s109
      %p120 = scmp.eq.s32.totalorder %s23, 0
      %p121 = por %p119, %p120
      %p122 = scmp.ne.s32.totalorder %s108, %s109
      %p123 = scmp.eq.s32.totalorder %s24, 7
      %p124 = por %p122, %p123
      %p126 = scmp.ne.s32.totalorder %s109, %s125
      %p127 = scmp.eq.s32.totalorder %s24, 0
      %p128 = por %p126, %p127
      %s129 = ssub.s32 %s25, %s44
      %s130 = ssub.s32 %s26, %s40
      %s131 = sor.u32 %s129, %s130
      %p132 = scmp.eq.s32.totalorder %s131, 0
      %s134 = sadd.s32 %s133, 1
      %s135 = scalar_select %p132, %s133, %s134
      %p138 = pneg %p132
      %p139 = scmp.eq.s32.totalorder %s18, 7
      %p140 = por %p138, %p139
      %p141 = scmp.ne.s32.totalorder %s133, %s136
      %p142 = scmp.eq.s32.totalorder %s18, 0
      %p143 = por %p141, %p142
      %p144 = scmp.ne.s32.totalorder %s133, %s136
      %p145 = scmp.eq.s32.totalorder %s23, 7
      %p146 = por %p144, %p145
      %p147 = scmp.ne.s32.totalorder %s136, %s137
      %p148 = scmp.eq.s32.totalorder %s23, 0
      %p149 = por %p147, %p148
      %p150 = scmp.ne.s32.totalorder %s136, %s137
      %p151 = scmp.eq.s32.totalorder %s24, 7
      %p152 = por %p150, %p151
      %p154 = scmp.ne.s32.totalorder %s137, %s153
      %p155 = scmp.eq.s32.totalorder %s24, 0
      %p156 = por %p154, %p155
      %p157 = scmp.le.s32.totalorder 1, %s18
      %p158 = scmp.lt.s32.totalorder %s18, 9
      %p159 = pnand %p157, %p158
      %p160 = pneg %p159
      // Predicated region
      $region9: #{tpu_custom_call.1} parent=5 // pred_check
        _
      $region10: #{tpu_custom_call.1} parent=5 // pred_check_branch
        %162 = sbr.rel (%p159) target = $region12
      $region11: #{tpu_custom_call.1} parent=5 // pred_region
        %s163 = ssub.s32 %s18, 1
      $region12: #{tpu_custom_call.1} parent=5 // pred_fallthru
        _
      %p164 = scmp.lt.s32.totalorder %s18, 8
      // Predicated region
      $region13: #{tpu_custom_call.1} parent=5 // pred_check
        %p165 = pneg %p164
      $region14: #{tpu_custom_call.1} parent=5 // pred_check_branch
        %167 = sbr.rel (%p165) target = $region16
      $region15: #{tpu_custom_call.1} parent=5 // pred_region
        // Predicated region
        $region17: #{tpu_custom_call.1} parent=15 // pred_check
          %p168 = pneg %p59
        $region18: #{tpu_custom_call.1} parent=15 // pred_check_branch
          %170 = sbr.rel (%p168) target = $region20
        $region19: #{tpu_custom_call.1} parent=15 // pred_region
          %s171 = sand.u32 %s49, 1
          %s172 = scalar_lea.sflag [#allocation4], %s171
          %s173 = sand.u32 %s49, 1
          %s174 = smul.addr %s173, 256
          %s175 = scalar_lea.vmem [#allocation3], %s174
          %s176 = smul.u32 16, %s25
          %s177 = smul.u32 2, %s27
          %s179 = ssub.s32 4096, 4096
          %180 = vsyncadd %s172, %s179
          %s181 = smul.addr %s176, 4
          %s182 = sadd.s32 %s177, %s181
          %s183 = smul.addr %s182, 128
          %s184 = scalar_lea.hbm %s0, %s183
          %s185 = sshll.u32 %s175, 4
          %s186 = int_to_ptr.vmem [resolvable:$true] %s185
          %191 = dma.hbm_to_vmem [thread:$0]  %s184, 4096, %s186, %s172, 512, 256, 16
        $region20: #{tpu_custom_call.1} parent=15 // pred_fallthru
          _
        // Predicated region
        $region21: #{tpu_custom_call.1} parent=15 // pred_check
          %p192 = pneg %p87
        $region22: #{tpu_custom_call.1} parent=15 // pred_check_branch
          %194 = sbr.rel (%p192) target = $region24
        $region23: #{tpu_custom_call.1} parent=15 // pred_region
          %s195 = sand.u32 %s18, 1
          %s196 = scalar_lea.sflag [#allocation7], %s195
          %s197 = sand.u32 %s77, 1
          %s198 = smul.addr %s197, 256
          %s199 = scalar_lea.vmem [#allocation6], %s198
          %s200 = smul.u32 16, %s25
          %s201 = smul.u32 2, %s27
          %s203 = ssub.s32 4096, 4096
          %204 = vsyncadd %s196, %s203
          %s205 = smul.addr %s200, 4
          %s206 = sadd.s32 %s201, %s205
          %s207 = smul.addr %s206, 128
          %s208 = scalar_lea.hbm %s1, %s207
          %s209 = sshll.u32 %s199, 4
          %s210 = int_to_ptr.vmem [resolvable:$true] %s209
          %215 = dma.hbm_to_vmem [thread:$0]  %s208, 4096, %s210, %s196, 512, 256, 16
        $region24: #{tpu_custom_call.1} parent=15 // pred_fallthru
          _
        // Predicated region
        $region25: #{tpu_custom_call.1} parent=15 // pred_check
          %p216 = pneg %p115
        $region26: #{tpu_custom_call.1} parent=15 // pred_check_branch
          %218 = sbr.rel (%p216) target = $region28
        $region27: #{tpu_custom_call.1} parent=15 // pred_region
          %s219 = sand.u32 %s18, 1
          %s220 = scalar_lea.sflag [#allocation7], %s219
          %s221 = sand.u32 %s105, 1
          %s222 = smul.addr %s221, 512
          %s223 = scalar_lea.vmem [#allocation8], %s222
          %s224 = smul.u32 32, %s27
          %s225 = smul.u32 2, %s26
          %s227 = ssub.s32 8192, 8192
          %228 = vsyncadd %s220, %s227
          %s229 = smul.addr %s224, 4
          %s230 = sadd.s32 %s225, %s229
          %s231 = smul.addr %s230, 128
          %s232 = scalar_lea.hbm %s2, %s231
          %s233 = sshll.u32 %s223, 4
          %s234 = int_to_ptr.vmem [resolvable:$true] %s233
          %239 = dma.hbm_to_vmem [thread:$0]  %s232, 8192, %s234, %s220, 512, 256, 16
        $region28: #{tpu_custom_call.1} parent=15 // pred_fallthru
          _
      $region16: #{tpu_custom_call.1} parent=5 // pred_fallthru
        _
      %p240 = scmp.le.s32.totalorder 1, %s18
      %p241 = scmp.lt.s32.totalorder %s18, 9
      %p242 = pnand %p240, %p241
      %p243 = pneg %p242
      // Predicated region
      $region29: #{tpu_custom_call.1} parent=5 // pred_check
        _
      $region30: #{tpu_custom_call.1} parent=5 // pred_check_branch
        %245 = sbr.rel (%p242) target = $region32
      $region31: #{tpu_custom_call.1} parent=5 // pred_region
        %s246 = ssub.s32 %s18, 1
        %s247 = sand.u32 %s52, 1
        %s248 = scalar_lea.sflag [#allocation4], %s247
        %s249 = sand.u32 %s52, 1
        %s250 = smul.addr %s249, 256
        %s251 = scalar_lea.vmem [#allocation3], %s250
        // Predicated region
        $region33: #{tpu_custom_call.1} parent=31 // pred_check
          %p252 = pneg %p65
        $region34: #{tpu_custom_call.1} parent=31 // pred_check_branch
          %254 = sbr.rel (%p252) target = $region36
        $region35: #{tpu_custom_call.1} parent=31 // pred_region
          %255 = dma.done %s248, 4096
        $region36: #{tpu_custom_call.1} parent=31 // pred_fallthru
          _
        %s256 = sand.u32 %s23, 1
        %s257 = scalar_lea.sflag [#allocation7], %s256
        %s258 = sand.u32 %s80, 1
        %s259 = smul.addr %s258, 256
        %s260 = scalar_lea.vmem [#allocation6], %s259
        // Predicated region
        $region37: #{tpu_custom_call.1} parent=31 // pred_check
          %p261 = pneg %p93
        $region38: #{tpu_custom_call.1} parent=31 // pred_check_branch
          %263 = sbr.rel (%p261) target = $region40
        $region39: #{tpu_custom_call.1} parent=31 // pred_region
          %264 = dma.done %s257, 4096
        $region40: #{tpu_custom_call.1} parent=31 // pred_fallthru
          _
        %s265 = sand.u32 %s23, 1
        %s266 = scalar_lea.sflag [#allocation7], %s265
        %s267 = sand.u32 %s108, 1
        %s268 = smul.addr %s267, 512
        %s269 = scalar_lea.vmem [#allocation8], %s268
        // Predicated region
        $region41: #{tpu_custom_call.1} parent=31 // pred_check
          %p270 = pneg %p121
        $region42: #{tpu_custom_call.1} parent=31 // pred_check_branch
          %272 = sbr.rel (%p270) target = $region44
        $region43: #{tpu_custom_call.1} parent=31 // pred_region
          %273 = dma.done %s266, 8192
        $region44: #{tpu_custom_call.1} parent=31 // pred_fallthru
          _
        %s274 = sand.u32 %s52, 1
        %s275 = scalar_lea.sflag [#allocation4], %s274
        %s276 = sand.u32 %s52, 1
        %s277 = smul.addr %s276, 256
        %s278 = scalar_lea.vmem [#allocation3], %s277
        %p279 = pneg %p65
        %p280 = pneg %p62
        %s281 = sand.u32 %s23, 1
        %s282 = scalar_lea.sflag [#allocation7], %s281
        %s283 = sand.u32 %s80, 1
        %s284 = smul.addr %s283, 256
        %s285 = scalar_lea.vmem [#allocation6], %s284
        %p286 = pneg %p93
        %p287 = pneg %p90
        %s288 = sand.u32 %s23, 1
        %s289 = scalar_lea.sflag [#allocation7], %s288
        %s290 = sand.u32 %s108, 1
        %s291 = smul.addr %s290, 512
        %s292 = scalar_lea.vmem [#allocation8], %s291
        %p293 = pneg %p121
        %p294 = pneg %p118
        %p295 = pneg %p149
        %p296 = pneg %p146
        %s297 = sand.u32 %s136, 1
        %s298 = scalar_lea.sflag [#allocation5], %s297
        %s299 = sand.u32 %s136, 1
        %s300 = smul.addr %s299, 256
        %s301 = scalar_lea.vmem [#allocation9], %s300
        %s302 = smul.u32 16, %s28
        %s303 = smul.u32 2, %s30
        %s304 = smul.u32 16, %s28
        %s305 = smul.u32 2, %s30
        %s306 = smul.u32 32, %s30
        %s307 = smul.u32 2, %s29
        %s308 = smul.u32 16, %s28
        %s309 = smul.u32 2, %s29
        %p310 = scmp.eq.s32.totalorder %s30, 0
        // Predicated region
        $region45: #{tpu_custom_call.1} parent=31 // pred_check
          %p311 = pneg %p310
        $region46: #{tpu_custom_call.1} parent=31 // pred_check_branch
          %313 = sbr.rel (%p311) target = $region48
        $region47: #{tpu_custom_call.1} parent=31 // pred_region
          %314 = vst [vmem:[#allocation2] sm:$0xff] 0.0
          %315 = vst [vmem:[#allocation2 + $0x8] sm:$0xff] 0.0
          %316 = vst [vmem:[#allocation2 + $0x10] sm:$0xff] 0.0
          %317 = vst [vmem:[#allocation2 + $0x18] sm:$0xff] 0.0
          %318 = vst [vmem:[#allocation2 + $0x20] sm:$0xff] 0.0
          %319 = vst [vmem:[#allocation2 + $0x28] sm:$0xff] 0.0
          %320 = vst [vmem:[#allocation2 + $0x30] sm:$0xff] 0.0
          %321 = vst [vmem:[#allocation2 + $0x38] sm:$0xff] 0.0
          %322 = vst [vmem:[#allocation2 + $0x40] sm:$0xff] 0.0
          %323 = vst [vmem:[#allocation2 + $0x48] sm:$0xff] 0.0
          %324 = vst [vmem:[#allocation2 + $0x50] sm:$0xff] 0.0
          %325 = vst [vmem:[#allocation2 + $0x58] sm:$0xff] 0.0
          %326 = vst [vmem:[#allocation2 + $0x60] sm:$0xff] 0.0
          %327 = vst [vmem:[#allocation2 + $0x68] sm:$0xff] 0.0
          %328 = vst [vmem:[#allocation2 + $0x70] sm:$0xff] 0.0
          %329 = vst [vmem:[#allocation2 + $0x78] sm:$0xff] 0.0
          %330 = vst [vmem:[#allocation2 + $0x80] sm:$0xff] 0.0
          %331 = vst [vmem:[#allocation2 + $0x88] sm:$0xff] 0.0
          %332 = vst [vmem:[#allocation2 + $0x90] sm:$0xff] 0.0
          %333 = vst [vmem:[#allocation2 + $0x98] sm:$0xff] 0.0
          %334 = vst [vmem:[#allocation2 + $0xa0] sm:$0xff] 0.0
          %335 = vst [vmem:[#allocation2 + $0xa8] sm:$0xff] 0.0
          %336 = vst [vmem:[#allocation2 + $0xb0] sm:$0xff] 0.0
          %337 = vst [vmem:[#allocation2 + $0xb8] sm:$0xff] 0.0
          %338 = vst [vmem:[#allocation2 + $0xc0] sm:$0xff] 0.0
          %339 = vst [vmem:[#allocation2 + $0xc8] sm:$0xff] 0.0
          %340 = vst [vmem:[#allocation2 + $0xd0] sm:$0xff] 0.0
          %341 = vst [vmem:[#allocation2 + $0xd8] sm:$0xff] 0.0
          %342 = vst [vmem:[#allocation2 + $0xe0] sm:$0xff] 0.0
          %343 = vst [vmem:[#allocation2 + $0xe8] sm:$0xff] 0.0
          %344 = vst [vmem:[#allocation2 + $0xf0] sm:$0xff] 0.0
          %345 = vst [vmem:[#allocation2 + $0xf8] sm:$0xff] 0.0
        $region48: #{tpu_custom_call.1} parent=31 // pred_fallthru
          _
        %v346 = vld [vmem:[%s260] sm:$0xff]
        %v347 = vld [vmem:[%s260 + $0x8] sm:$0xff]
        %v348 = vld [vmem:[%s260 + $0x10] sm:$0xff]
        %v349 = vld [vmem:[%s260 + $0x18] sm:$0xff]
        %v350 = vld [vmem:[%s260 + $0x20] sm:$0xff]
        %v351 = vld [vmem:[%s260 + $0x28] sm:$0xff]
        %v352 = vld [vmem:[%s260 + $0x30] sm:$0xff]
        %v353 = vld [vmem:[%s260 + $0x38] sm:$0xff]
        %v354 = vld [vmem:[%s260 + $0x40] sm:$0xff]
        %v355 = vld [vmem:[%s260 + $0x48] sm:$0xff]
        %v356 = vld [vmem:[%s260 + $0x50] sm:$0xff]
        %v357 = vld [vmem:[%s260 + $0x58] sm:$0xff]
        %v358 = vld [vmem:[%s260 + $0x60] sm:$0xff]
        %v359 = vld [vmem:[%s260 + $0x68] sm:$0xff]
        %v360 = vld [vmem:[%s260 + $0x70] sm:$0xff]
        %v361 = vld [vmem:[%s260 + $0x78] sm:$0xff]
        %v362 = vld [vmem:[%s260 + $0x80] sm:$0xff]
        %v363 = vld [vmem:[%s260 + $0x88] sm:$0xff]
        %v364 = vld [vmem:[%s260 + $0x90] sm:$0xff]
        %v365 = vld [vmem:[%s260 + $0x98] sm:$0xff]
        %v366 = vld [vmem:[%s260 + $0xa0] sm:$0xff]
        %v367 = vld [vmem:[%s260 + $0xa8] sm:$0xff]
        %v368 = vld [vmem:[%s260 + $0xb0] sm:$0xff]
        %v369 = vld [vmem:[%s260 + $0xb8] sm:$0xff]
        %v370 = vld [vmem:[%s260 + $0xc0] sm:$0xff]
        %v371 = vld [vmem:[%s260 + $0xc8] sm:$0xff]
        %v372 = vld [vmem:[%s260 + $0xd0] sm:$0xff]
        %v373 = vld [vmem:[%s260 + $0xd8] sm:$0xff]
        %v374 = vld [vmem:[%s260 + $0xe0] sm:$0xff]
        %v375 = vld [vmem:[%s260 + $0xe8] sm:$0xff]
        %v376 = vld [vmem:[%s260 + $0xf0] sm:$0xff]
        %v377 = vld [vmem:[%s260 + $0xf8] sm:$0xff]
        %vm378 = vcmp.ge.u32.totalorder %v346, 2576980378
        %vm379 = vcmp.ge.u32.totalorder %v347, 2576980378
        %vm380 = vcmp.ge.u32.totalorder %v348, 2576980378
        %vm381 = vcmp.ge.u32.totalorder %v349, 2576980378
        %vm382 = vcmp.ge.u32.totalorder %v350, 2576980378
        %vm383 = vcmp.ge.u32.totalorder %v351, 2576980378
        %vm384 = vcmp.ge.u32.totalorder %v352, 2576980378
        %vm385 = vcmp.ge.u32.totalorder %v353, 2576980378
        %vm386 = vcmp.ge.u32.totalorder %v354, 2576980378
        %vm387 = vcmp.ge.u32.totalorder %v355, 2576980378
        %vm388 = vcmp.ge.u32.totalorder %v356, 2576980378
        %vm389 = vcmp.ge.u32.totalorder %v357, 2576980378
        %vm390 = vcmp.ge.u32.totalorder %v358, 2576980378
        %vm391 = vcmp.ge.u32.totalorder %v359, 2576980378
        %vm392 = vcmp.ge.u32.totalorder %v360, 2576980378
        %vm393 = vcmp.ge.u32.totalorder %v361, 2576980378
        %vm394 = vcmp.ge.u32.totalorder %v362, 2576980378
        %vm395 = vcmp.ge.u32.totalorder %v363, 2576980378
        %vm396 = vcmp.ge.u32.totalorder %v364, 2576980378
        %vm397 = vcmp.ge.u32.totalorder %v365, 2576980378
        %vm398 = vcmp.ge.u32.totalorder %v366, 2576980378
        %vm399 = vcmp.ge.u32.totalorder %v367, 2576980378
        %vm400 = vcmp.ge.u32.totalorder %v368, 2576980378
        %vm401 = vcmp.ge.u32.totalorder %v369, 2576980378
        %vm402 = vcmp.ge.u32.totalorder %v370, 2576980378
        %vm403 = vcmp.ge.u32.totalorder %v371, 2576980378
        %vm404 = vcmp.ge.u32.totalorder %v372, 2576980378
        %vm405 = vcmp.ge.u32.totalorder %v373, 2576980378
        %vm406 = vcmp.ge.u32.totalorder %v374, 2576980378
        %vm407 = vcmp.ge.u32.totalorder %v375, 2576980378
        %vm408 = vcmp.ge.u32.totalorder %v376, 2576980378
        %vm409 = vcmp.ge.u32.totalorder %v377, 2576980378
        %v410 = vld [vmem:[%s251] sm:$0xff]
        %v411 = vld [vmem:[%s251 + $0x8] sm:$0xff]
        %v412 = vld [vmem:[%s251 + $0x10] sm:$0xff]
        %v413 = vld [vmem:[%s251 + $0x18] sm:$0xff]
        %v414 = vld [vmem:[%s251 + $0x20] sm:$0xff]
        %v415 = vld [vmem:[%s251 + $0x28] sm:$0xff]
        %v416 = vld [vmem:[%s251 + $0x30] sm:$0xff]
        %v417 = vld [vmem:[%s251 + $0x38] sm:$0xff]
        %v418 = vld [vmem:[%s251 + $0x40] sm:$0xff]
        %v419 = vld [vmem:[%s251 + $0x48] sm:$0xff]
        %v420 = vld [vmem:[%s251 + $0x50] sm:$0xff]
        %v421 = vld [vmem:[%s251 + $0x58] sm:$0xff]
        %v422 = vld [vmem:[%s251 + $0x60] sm:$0xff]
        %v423 = vld [vmem:[%s251 + $0x68] sm:$0xff]
        %v424 = vld [vmem:[%s251 + $0x70] sm:$0xff]
        %v425 = vld [vmem:[%s251 + $0x78] sm:$0xff]
        %v426 = vld [vmem:[%s251 + $0x80] sm:$0xff]
        %v427 = vld [vmem:[%s251 + $0x88] sm:$0xff]
        %v428 = vld [vmem:[%s251 + $0x90] sm:$0xff]
        %v429 = vld [vmem:[%s251 + $0x98] sm:$0xff]
        %v430 = vld [vmem:[%s251 + $0xa0] sm:$0xff]
        %v431 = vld [vmem:[%s251 + $0xa8] sm:$0xff]
        %v432 = vld [vmem:[%s251 + $0xb0] sm:$0xff]
        %v433 = vld [vmem:[%s251 + $0xb8] sm:$0xff]
        %v434 = vld [vmem:[%s251 + $0xc0] sm:$0xff]
        %v435 = vld [vmem:[%s251 + $0xc8] sm:$0xff]
        %v436 = vld [vmem:[%s251 + $0xd0] sm:$0xff]
        %v437 = vld [vmem:[%s251 + $0xd8] sm:$0xff]
        %v438 = vld [vmem:[%s251 + $0xe0] sm:$0xff]
        %v439 = vld [vmem:[%s251 + $0xe8] sm:$0xff]
        %v440 = vld [vmem:[%s251 + $0xf0] sm:$0xff]
        %v441 = vld [vmem:[%s251 + $0xf8] sm:$0xff]
        %v442 = vmul.f32 %v410, 2.5
        %v443 = vmul.f32 %v411, 2.5
        %v444 = vmul.f32 %v412, 2.5
        %v445 = vmul.f32 %v413, 2.5
        %v446 = vmul.f32 %v414, 2.5
        %v447 = vmul.f32 %v415, 2.5
        %v448 = vmul.f32 %v416, 2.5
        %v449 = vmul.f32 %v417, 2.5
        %v450 = vmul.f32 %v418, 2.5
        %v451 = vmul.f32 %v419, 2.5
        %v452 = vmul.f32 %v420, 2.5
        %v453 = vmul.f32 %v421, 2.5
        %v454 = vmul.f32 %v422, 2.5
        %v455 = vmul.f32 %v423, 2.5
        %v456 = vmul.f32 %v424, 2.5
        %v457 = vmul.f32 %v425, 2.5
        %v458 = vmul.f32 %v426, 2.5
        %v459 = vmul.f32 %v427, 2.5
        %v460 = vmul.f32 %v428, 2.5
        %v461 = vmul.f32 %v429, 2.5
        %v462 = vmul.f32 %v430, 2.5
        %v463 = vmul.f32 %v431, 2.5
        %v464 = vmul.f32 %v432, 2.5
        %v465 = vmul.f32 %v433, 2.5
        %v466 = vmul.f32 %v434, 2.5
        %v467 = vmul.f32 %v435, 2.5
        %v468 = vmul.f32 %v436, 2.5
        %v469 = vmul.f32 %v437, 2.5
        %v470 = vmul.f32 %v438, 2.5
        %v471 = vmul.f32 %v439, 2.5
        %v472 = vmul.f32 %v440, 2.5
        %v473 = vmul.f32 %v441, 2.5
        %v474 = vsel %vm378, %v442, 0.0
        %v475 = vsel %vm379, %v443, 0.0
        %v476 = vsel %vm380, %v444, 0.0
        %v477 = vsel %vm381, %v445, 0.0
        %v478 = vsel %vm382, %v446, 0.0
        %v479 = vsel %vm383, %v447, 0.0
        %v480 = vsel %vm384, %v448, 0.0
        %v481 = vsel %vm385, %v449, 0.0
        %v482 = vsel %vm386, %v450, 0.0
        %v483 = vsel %vm387, %v451, 0.0
        %v484 = vsel %vm388, %v452, 0.0
        %v485 = vsel %vm389, %v453, 0.0
        %v486 = vsel %vm390, %v454, 0.0
        %v487 = vsel %vm391, %v455, 0.0
        %v488 = vsel %vm392, %v456, 0.0
        %v489 = vsel %vm393, %v457, 0.0
        %v490 = vsel %vm394, %v458, 0.0
        %v491 = vsel %vm395, %v459, 0.0
        %v492 = vsel %vm396, %v460, 0.0
        %v493 = vsel %vm397, %v461, 0.0
        %v494 = vsel %vm398, %v462, 0.0
        %v495 = vsel %vm399, %v463, 0.0
        %v496 = vsel %vm400, %v464, 0.0
        %v497 = vsel %vm401, %v465, 0.0
        %v498 = vsel %vm402, %v466, 0.0
        %v499 = vsel %vm403, %v467, 0.0
        %v500 = vsel %vm404, %v468, 0.0
        %v501 = vsel %vm405, %v469, 0.0
        %v502 = vsel %vm406, %v470, 0.0
        %v503 = vsel %vm407, %v471, 0.0
        %v504 = vsel %vm408, %v472, 0.0
        %v505 = vsel %vm409, %v473, 0.0
        %v506 = vld [vmem:[#allocation2] sm:$0xff]
        %v507 = vld [vmem:[#allocation2 + $0x8] sm:$0xff]
        %v508 = vld [vmem:[#allocation2 + $0x10] sm:$0xff]
        %v509 = vld [vmem:[#allocation2 + $0x18] sm:$0xff]
        %v510 = vld [vmem:[#allocation2 + $0x20] sm:$0xff]
        %v511 = vld [vmem:[#allocation2 + $0x28] sm:$0xff]
        %v512 = vld [vmem:[#allocation2 + $0x30] sm:$0xff]
        %v513 = vld [vmem:[#allocation2 + $0x38] sm:$0xff]
        %v514 = vld [vmem:[#allocation2 + $0x40] sm:$0xff]
        %v515 = vld [vmem:[#allocation2 + $0x48] sm:$0xff]
        %v516 = vld [vmem:[#allocation2 + $0x50] sm:$0xff]
        %v517 = vld [vmem:[#allocation2 + $0x58] sm:$0xff]
        %v518 = vld [vmem:[#allocation2 + $0x60] sm:$0xff]
        %v519 = vld [vmem:[#allocation2 + $0x68] sm:$0xff]
        %v520 = vld [vmem:[#allocation2 + $0x70] sm:$0xff]
        %v521 = vld [vmem:[#allocation2 + $0x78] sm:$0xff]
        %v522 = vld [vmem:[#allocation2 + $0x80] sm:$0xff]
        %v523 = vld [vmem:[#allocation2 + $0x88] sm:$0xff]
        %v524 = vld [vmem:[#allocation2 + $0x90] sm:$0xff]
        %v525 = vld [vmem:[#allocation2 + $0x98] sm:$0xff]
        %v526 = vld [vmem:[#allocation2 + $0xa0] sm:$0xff]
        %v527 = vld [vmem:[#allocation2 + $0xa8] sm:$0xff]
        %v528 = vld [vmem:[#allocation2 + $0xb0] sm:$0xff]
        %v529 = vld [vmem:[#allocation2 + $0xb8] sm:$0xff]
        %v530 = vld [vmem:[#allocation2 + $0xc0] sm:$0xff]
        %v531 = vld [vmem:[#allocation2 + $0xc8] sm:$0xff]
        %v532 = vld [vmem:[#allocation2 + $0xd0] sm:$0xff]
        %v533 = vld [vmem:[#allocation2 + $0xd8] sm:$0xff]
        %v534 = vld [vmem:[#allocation2 + $0xe0] sm:$0xff]
        %v535 = vld [vmem:[#allocation2 + $0xe8] sm:$0xff]
        %v536 = vld [vmem:[#allocation2 + $0xf0] sm:$0xff]
        %v537 = vld [vmem:[#allocation2 + $0xf8] sm:$0xff]
        %v538 = vpack.c.bf16 %v476, %v474
        %v539 = vpack.c.bf16 %v477, %v475
        %v540 = vpack.c.bf16 %v480, %v478
        %v541 = vpack.c.bf16 %v481, %v479
        %v542 = vpack.c.bf16 %v484, %v482
        %v543 = vpack.c.bf16 %v485, %v483
        %v544 = vpack.c.bf16 %v488, %v486
        %v545 = vpack.c.bf16 %v489, %v487
        %v546 = vpack.c.bf16 %v492, %v490
        %v547 = vpack.c.bf16 %v493, %v491
        %v548 = vpack.c.bf16 %v496, %v494
        %v549 = vpack.c.bf16 %v497, %v495
        %v550 = vpack.c.bf16 %v500, %v498
        %v551 = vpack.c.bf16 %v501, %v499
        %v552 = vpack.c.bf16 %v504, %v502
        %v553 = vpack.c.bf16 %v505, %v503
        %v554 = vld [vmem:[%s269] sm:$0xff]
        %v555 = vld [vmem:[%s269 + $0x8] sm:$0xff]
        %v556 = vld [vmem:[%s269 + $0x10] sm:$0xff]
        %v557 = vld [vmem:[%s269 + $0x18] sm:$0xff]
        %v558 = vld [vmem:[%s269 + $0x20] sm:$0xff]
        %v559 = vld [vmem:[%s269 + $0x28] sm:$0xff]
        %v560 = vld [vmem:[%s269 + $0x30] sm:$0xff]
        %v561 = vld [vmem:[%s269 + $0x38] sm:$0xff]
        %v562 = vld [vmem:[%s269 + $0x40] sm:$0xff]
        %v563 = vld [vmem:[%s269 + $0x48] sm:$0xff]
        %v564 = vld [vmem:[%s269 + $0x50] sm:$0xff]
        %v565 = vld [vmem:[%s269 + $0x58] sm:$0xff]
        %v566 = vld [vmem:[%s269 + $0x60] sm:$0xff]
        %v567 = vld [vmem:[%s269 + $0x68] sm:$0xff]
        %v568 = vld [vmem:[%s269 + $0x70] sm:$0xff]
        %v569 = vld [vmem:[%s269 + $0x78] sm:$0xff]
        %v570 = vld [vmem:[%s269 + $0x80] sm:$0xff]
        %v571 = vld [vmem:[%s269 + $0x88] sm:$0xff]
        %v572 = vld [vmem:[%s269 + $0x90] sm:$0xff]
        %v573 = vld [vmem:[%s269 + $0x98] sm:$0xff]
        %v574 = vld [vmem:[%s269 + $0xa0] sm:$0xff]
        %v575 = vld [vmem:[%s269 + $0xa8] sm:$0xff]
        %v576 = vld [vmem:[%s269 + $0xb0] sm:$0xff]
        %v577 = vld [vmem:[%s269 + $0xb8] sm:$0xff]
        %v578 = vld [vmem:[%s269 + $0xc0] sm:$0xff]
        %v579 = vld [vmem:[%s269 + $0xc8] sm:$0xff]
        %v580 = vld [vmem:[%s269 + $0xd0] sm:$0xff]
        %v581 = vld [vmem:[%s269 + $0xd8] sm:$0xff]
        %v582 = vld [vmem:[%s269 + $0xe0] sm:$0xff]
        %v583 = vld [vmem:[%s269 + $0xe8] sm:$0xff]
        %v584 = vld [vmem:[%s269 + $0xf0] sm:$0xff]
        %v585 = vld [vmem:[%s269 + $0xf8] sm:$0xff]
        %v586 = vld [vmem:[%s269 + $0x100] sm:$0xff]
        %v587 = vld [vmem:[%s269 + $0x108] sm:$0xff]
        %v588 = vld [vmem:[%s269 + $0x110] sm:$0xff]
        %v589 = vld [vmem:[%s269 + $0x118] sm:$0xff]
        %v590 = vld [vmem:[%s269 + $0x120] sm:$0xff]
        %v591 = vld [vmem:[%s269 + $0x128] sm:$0xff]
        %v592 = vld [vmem:[%s269 + $0x130] sm:$0xff]
        %v593 = vld [vmem:[%s269 + $0x138] sm:$0xff]
        %v594 = vld [vmem:[%s269 + $0x140] sm:$0xff]
        %v595 = vld [vmem:[%s269 + $0x148] sm:$0xff]
        %v596 = vld [vmem:[%s269 + $0x150] sm:$0xff]
        %v597 = vld [vmem:[%s269 + $0x158] sm:$0xff]
        %v598 = vld [vmem:[%s269 + $0x160] sm:$0xff]
        %v599 = vld [vmem:[%s269 + $0x168] sm:$0xff]
        %v600 = vld [vmem:[%s269 + $0x170] sm:$0xff]
        %v601 = vld [vmem:[%s269 + $0x178] sm:$0xff]
        %v602 = vld [vmem:[%s269 + $0x180] sm:$0xff]
        %v603 = vld [vmem:[%s269 + $0x188] sm:$0xff]
        %v604 = vld [vmem:[%s269 + $0x190] sm:$0xff]
        %v605 = vld [vmem:[%s269 + $0x198] sm:$0xff]
        %v606 = vld [vmem:[%s269 + $0x1a0] sm:$0xff]
        %v607 = vld [vmem:[%s269 + $0x1a8] sm:$0xff]
        %v608 = vld [vmem:[%s269 + $0x1b0] sm:$0xff]
        %v609 = vld [vmem:[%s269 + $0x1b8] sm:$0xff]
        %v610 = vld [vmem:[%s269 + $0x1c0] sm:$0xff]
        %v611 = vld [vmem:[%s269 + $0x1c8] sm:$0xff]
        %v612 = vld [vmem:[%s269 + $0x1d0] sm:$0xff]
        %v613 = vld [vmem:[%s269 + $0x1d8] sm:$0xff]
        %v614 = vld [vmem:[%s269 + $0x1e0] sm:$0xff]
        %v615 = vld [vmem:[%s269 + $0x1e8] sm:$0xff]
        %v616 = vld [vmem:[%s269 + $0x1f0] sm:$0xff]
        %v617 = vld [vmem:[%s269 + $0x1f8] sm:$0xff]
        %v618 = vpack.c.bf16 %v556, %v554
        %v619 = vpack.c.bf16 %v557, %v555
        %v620 = vpack.c.bf16 %v560, %v558
        %v621 = vpack.c.bf16 %v561, %v559
        %v622 = vpack.c.bf16 %v564, %v562
        %v623 = vpack.c.bf16 %v565, %v563
        %v624 = vpack.c.bf16 %v568, %v566
        %v625 = vpack.c.bf16 %v569, %v567
        %v626 = vpack.c.bf16 %v572, %v570
        %v627 = vpack.c.bf16 %v573, %v571
        %v628 = vpack.c.bf16 %v576, %v574
        %v629 = vpack.c.bf16 %v577, %v575
        %v630 = vpack.c.bf16 %v580, %v578
        %v631 = vpack.c.bf16 %v581, %v579
        %v632 = vpack.c.bf16 %v584, %v582
        %v633 = vpack.c.bf16 %v585, %v583
        %v634 = vpack.c.bf16 %v588, %v586
        %v635 = vpack.c.bf16 %v589, %v587
        %v636 = vpack.c.bf16 %v592, %v590
        %v637 = vpack.c.bf16 %v593, %v591
        %v638 = vpack.c.bf16 %v596, %v594
        %v639 = vpack.c.bf16 %v597, %v595
        %v640 = vpack.c.bf16 %v600, %v598
        %v641 = vpack.c.bf16 %v601, %v599
        %v642 = vpack.c.bf16 %v604, %v602
        %v643 = vpack.c.bf16 %v605, %v603
        %v644 = vpack.c.bf16 %v608, %v606
        %v645 = vpack.c.bf16 %v609, %v607
        %v646 = vpack.c.bf16 %v612, %v610
        %v647 = vpack.c.bf16 %v613, %v611
        %v648 = vpack.c.bf16 %v616, %v614
        %v649 = vpack.c.bf16 %v617, %v615
        %650 = vmatprep.subr.bf16.mxu0 %v619
        %651 = vmatpush1.bf16.msra.mxu0 %v618
        %652 = vmatprep.subr.bf16.mxu0 %v621
        %653 = vmatpush1.bf16.msra.mxu0 %v620
        %654 = vmatprep.subr.bf16.mxu0 %v623
        %655 = vmatpush1.bf16.msra.mxu0 %v622
        %656 = vmatprep.subr.bf16.mxu0 %v625
        %657 = vmatpush1.bf16.msra.mxu0 %v624
        %658 = vmatprep.subr.bf16.mxu0 %v627
        %659 = vmatpush1.bf16.msra.mxu0 %v626
        %660 = vmatprep.subr.bf16.mxu0 %v629
        %661 = vmatpush1.bf16.msra.mxu0 %v628
        %662 = vmatprep.subr.bf16.mxu0 %v631
        %663 = vmatpush1.bf16.msra.mxu0 %v630
        %664 = vmatprep.subr.bf16.mxu0 %v633
        %665 = vmatpush1.bf16.msra.mxu0 %v632
        %666 = vmatprep.subr.bf16.mxu0 %v635
        %667 = vmatpush1.bf16.msra.mxu0 %v634
        %668 = vmatprep.subr.bf16.mxu0 %v637
        %669 = vmatpush1.bf16.msra.mxu0 %v636
        %670 = vmatprep.subr.bf16.mxu0 %v639
        %671 = vmatpush1.bf16.msra.mxu0 %v638
        %672 = vmatprep.subr.bf16.mxu0 %v641
        %673 = vmatpush1.bf16.msra.mxu0 %v640
        %674 = vmatprep.subr.bf16.mxu0 %v643
        %675 = vmatpush1.bf16.msra.mxu0 %v642
        %676 = vmatprep.subr.bf16.mxu0 %v645
        %677 = vmatpush1.bf16.msra.mxu0 %v644
        %678 = vmatprep.subr.bf16.mxu0 %v647
        %679 = vmatpush1.bf16.msra.mxu0 %v646
        %680 = vmatprep.subr.bf16.mxu0 %v649
        %681 = vmatpush1.bf16.msra.mxu0 %v648
        %682 = vmatprep.mubr.bf16.mxu0 %v539
        %683 = vmatmul.mubr.bf16.gmra.mrb[0].mxu0 %v538
        %v684 = vpop.f32.mrb[0].mxu0
        %v685 = vadd.f32 0.0, %v684
        %v686 = vpop.f32.mrb[0].mxu0
        %v687 = vadd.f32 0.0, %v686
        %v688 = vpop.f32.mrb[0].mxu0
        %v689 = vadd.f32 0.0, %v688
        %v690 = vpop.f32.mrb[0].mxu0
        %v691 = vadd.f32 0.0, %v690
        %692 = vmatprep.mubr.bf16.mxu0 %v541
        %693 = vmatmul.mubr.bf16.gmra.mrb[0].mxu0 %v540
        %v694 = vpop.f32.mrb[0].mxu0
        %v695 = vadd.f32 0.0, %v694
        %v696 = vpop.f32.mrb[0].mxu0
        %v697 = vadd.f32 0.0, %v696
        %v698 = vpop.f32.mrb[0].mxu0
        %v699 = vadd.f32 0.0, %v698
        %v700 = vpop.f32.mrb[0].mxu0
        %v701 = vadd.f32 0.0, %v700
        %702 = vmatprep.mubr.bf16.mxu0 %v543
        %703 = vmatmul.mubr.bf16.gmra.mrb[0].mxu0 %v542
        %v704 = vpop.f32.mrb[0].mxu0
        %v705 = vadd.f32 0.0, %v704
        %v706 = vpop.f32.mrb[0].mxu0
        %v707 = vadd.f32 0.0, %v706
        %v708 = vpop.f32.mrb[0].mxu0
        %v709 = vadd.f32 0.0, %v708
        %v710 = vpop.f32.mrb[0].mxu0
        %v711 = vadd.f32 0.0, %v710
        %712 = vmatprep.mubr.bf16.mxu0 %v545
        %713 = vmatmul.mubr.bf16.gmra.mrb[0].mxu0 %v544
        %v714 = vpop.f32.mrb[0].mxu0
        %v715 = vadd.f32 0.0, %v714
        %v716 = vpop.f32.mrb[0].mxu0
        %v717 = vadd.f32 0.0, %v716
        %v718 = vpop.f32.mrb[0].mxu0
        %v719 = vadd.f32 0.0, %v718
        %v720 = vpop.f32.mrb[0].mxu0
        %v721 = vadd.f32 0.0, %v720
        %722 = vmatprep.mubr.bf16.mxu0 %v547
        %723 = vmatmul.mubr.bf16.gmra.mrb[0].mxu0 %v546
        %v724 = vpop.f32.mrb[0].mxu0
        %v725 = vadd.f32 0.0, %v724
        %v726 = vpop.f32.mrb[0].mxu0
        %v727 = vadd.f32 0.0, %v726
        %v728 = vpop.f32.mrb[0].mxu0
        %v729 = vadd.f32 0.0, %v728
        %v730 = vpop.f32.mrb[0].mxu0
        %v731 = vadd.f32 0.0, %v730
        %732 = vmatprep.mubr.bf16.mxu0 %v549
        %733 = vmatmul.mubr.bf16.gmra.mrb[0].mxu0 %v548
        %v734 = vpop.f32.mrb[0].mxu0
        %v735 = vadd.f32 0.0, %v734
        %v736 = vpop.f32.mrb[0].mxu0
        %v737 = vadd.f32 0.0, %v736
        %v738 = vpop.f32.mrb[0].mxu0
        %v739 = vadd.f32 0.0, %v738
        %v740 = vpop.f32.mrb[0].mxu0
        %v741 = vadd.f32 0.0, %v740
        %742 = vmatprep.mubr.bf16.mxu0 %v551
        %743 = vmatmul.mubr.bf16.gmra.mrb[0].mxu0 %v550
        %v744 = vpop.f32.mrb[0].mxu0
        %v745 = vadd.f32 0.0, %v744
        %v746 = vpop.f32.mrb[0].mxu0
        %v747 = vadd.f32 0.0, %v746
        %v748 = vpop.f32.mrb[0].mxu0
        %v749 = vadd.f32 0.0, %v748
        %v750 = vpop.f32.mrb[0].mxu0
        %v751 = vadd.f32 0.0, %v750
        %752 = vmatprep.mubr.bf16.mxu0 %v553
        %753 = vmatmul.mubr.bf16.gmra.mrb[0].mxu0 %v552
        %v754 = vpop.f32.mrb[0].mxu0
        %v755 = vadd.f32 0.0, %v754
        %v756 = vpop.f32.mrb[0].mxu0
        %v757 = vadd.f32 0.0, %v756
        %v758 = vpop.f32.mrb[0].mxu0
        %v759 = vadd.f32 0.0, %v758
        %v760 = vpop.f32.mrb[0].mxu0
        %v761 = vadd.f32 0.0, %v760
        %762 = vdwg.mxu0
        %v763 = vadd.f32 %v506, %v685
        %v764 = vadd.f32 %v507, %v687
        %v765 = vadd.f32 %v508, %v689
        %v766 = vadd.f32 %v509, %v691
        %v767 = vadd.f32 %v510, %v695
        %v768 = vadd.f32 %v511, %v697
        %v769 = vadd.f32 %v512, %v699
        %v770 = vadd.f32 %v513, %v701
        %v771 = vadd.f32 %v514, %v705
        %v772 = vadd.f32 %v515, %v707
        %v773 = vadd.f32 %v516, %v709
        %v774 = vadd.f32 %v517, %v711
        %v775 = vadd.f32 %v518, %v715
        %v776 = vadd.f32 %v519, %v717
        %v777 = vadd.f32 %v520, %v719
        %v778 = vadd.f32 %v521, %v721
        %v779 = vadd.f32 %v522, %v725
        %v780 = vadd.f32 %v523, %v727
        %v781 = vadd.f32 %v524, %v729
        %v782 = vadd.f32 %v525, %v731
        %v783 = vadd.f32 %v526, %v735
        %v784 = vadd.f32 %v527, %v737
        %v785 = vadd.f32 %v528, %v739
        %v786 = vadd.f32 %v529, %v741
        %v787 = vadd.f32 %v530, %v745
        %v788 = vadd.f32 %v531, %v747
        %v789 = vadd.f32 %v532, %v749
        %v790 = vadd.f32 %v533, %v751
        %v791 = vadd.f32 %v534, %v755
        %v792 = vadd.f32 %v535, %v757
        %v793 = vadd.f32 %v536, %v759
        %v794 = vadd.f32 %v537, %v761
        %795 = vst [vmem:[#allocation2] sm:$0xff] %v763
        %796 = vst [vmem:[#allocation2 + $0x8] sm:$0xff] %v764
        %797 = vst [vmem:[#allocation2 + $0x10] sm:$0xff] %v765
        %798 = vst [vmem:[#allocation2 + $0x18] sm:$0xff] %v766
        %799 = vst [vmem:[#allocation2 + $0x20] sm:$0xff] %v767
        %800 = vst [vmem:[#allocation2 + $0x28] sm:$0xff] %v768
        %801 = vst [vmem:[#allocation2 + $0x30] sm:$0xff] %v769
        %802 = vst [vmem:[#allocation2 + $0x38] sm:$0xff] %v770
        %803 = vst [vmem:[#allocation2 + $0x40] sm:$0xff] %v771
        %804 = vst [vmem:[#allocation2 + $0x48] sm:$0xff] %v772
        %805 = vst [vmem:[#allocation2 + $0x50] sm:$0xff] %v773
        %806 = vst [vmem:[#allocation2 + $0x58] sm:$0xff] %v774
        %807 = vst [vmem:[#allocation2 + $0x60] sm:$0xff] %v775
        %808 = vst [vmem:[#allocation2 + $0x68] sm:$0xff] %v776
        %809 = vst [vmem:[#allocation2 + $0x70] sm:$0xff] %v777
        %810 = vst [vmem:[#allocation2 + $0x78] sm:$0xff] %v778
        %811 = vst [vmem:[#allocation2 + $0x80] sm:$0xff] %v779
        %812 = vst [vmem:[#allocation2 + $0x88] sm:$0xff] %v780
        %813 = vst [vmem:[#allocation2 + $0x90] sm:$0xff] %v781
        %814 = vst [vmem:[#allocation2 + $0x98] sm:$0xff] %v782
        %815 = vst [vmem:[#allocation2 + $0xa0] sm:$0xff] %v783
        %816 = vst [vmem:[#allocation2 + $0xa8] sm:$0xff] %v784
        %817 = vst [vmem:[#allocation2 + $0xb0] sm:$0xff] %v785
        %818 = vst [vmem:[#allocation2 + $0xb8] sm:$0xff] %v786
        %819 = vst [vmem:[#allocation2 + $0xc0] sm:$0xff] %v787
        %820 = vst [vmem:[#allocation2 + $0xc8] sm:$0xff] %v788
        %821 = vst [vmem:[#allocation2 + $0xd0] sm:$0xff] %v789
        %822 = vst [vmem:[#allocation2 + $0xd8] sm:$0xff] %v790
        %823 = vst [vmem:[#allocation2 + $0xe0] sm:$0xff] %v791
        %824 = vst [vmem:[#allocation2 + $0xe8] sm:$0xff] %v792
        %825 = vst [vmem:[#allocation2 + $0xf0] sm:$0xff] %v793
        %826 = vst [vmem:[#allocation2 + $0xf8] sm:$0xff] %v794
        %p827 = scmp.eq.s32.totalorder %s30, 1
        // Predicated region
        $region49: #{tpu_custom_call.1} parent=31 // pred_check
          %p828 = pneg %p827
        $region50: #{tpu_custom_call.1} parent=31 // pred_check_branch
          %830 = sbr.rel (%p828) target = $region52
        $region51: #{tpu_custom_call.1} parent=31 // pred_region
          %v831 = vld [vmem:[#allocation2] sm:$0xff]
          %v832 = vld [vmem:[#allocation2 + $0x8] sm:$0xff]
          %v833 = vld [vmem:[#allocation2 + $0x10] sm:$0xff]
          %v834 = vld [vmem:[#allocation2 + $0x18] sm:$0xff]
          %v835 = vld [vmem:[#allocation2 + $0x20] sm:$0xff]
          %v836 = vld [vmem:[#allocation2 + $0x28] sm:$0xff]
          %v837 = vld [vmem:[#allocation2 + $0x30] sm:$0xff]
          %v838 = vld [vmem:[#allocation2 + $0x38] sm:$0xff]
          %v839 = vld [vmem:[#allocation2 + $0x40] sm:$0xff]
          %v840 = vld [vmem:[#allocation2 + $0x48] sm:$0xff]
          %v841 = vld [vmem:[#allocation2 + $0x50] sm:$0xff]
          %v842 = vld [vmem:[#allocation2 + $0x58] sm:$0xff]
          %v843 = vld [vmem:[#allocation2 + $0x60] sm:$0xff]
          %v844 = vld [vmem:[#allocation2 + $0x68] sm:$0xff]
          %v845 = vld [vmem:[#allocation2 + $0x70] sm:$0xff]
          %v846 = vld [vmem:[#allocation2 + $0x78] sm:$0xff]
          %v847 = vld [vmem:[#allocation2 + $0x80] sm:$0xff]
          %v848 = vld [vmem:[#allocation2 + $0x88] sm:$0xff]
          %v849 = vld [vmem:[#allocation2 + $0x90] sm:$0xff]
          %v850 = vld [vmem:[#allocation2 + $0x98] sm:$0xff]
          %v851 = vld [vmem:[#allocation2 + $0xa0] sm:$0xff]
          %v852 = vld [vmem:[#allocation2 + $0xa8] sm:$0xff]
          %v853 = vld [vmem:[#allocation2 + $0xb0] sm:$0xff]
          %v854 = vld [vmem:[#allocation2 + $0xb8] sm:$0xff]
          %v855 = vld [vmem:[#allocation2 + $0xc0] sm:$0xff]
          %v856 = vld [vmem:[#allocation2 + $0xc8] sm:$0xff]
          %v857 = vld [vmem:[#allocation2 + $0xd0] sm:$0xff]
          %v858 = vld [vmem:[#allocation2 + $0xd8] sm:$0xff]
          %v859 = vld [vmem:[#allocation2 + $0xe0] sm:$0xff]
          %v860 = vld [vmem:[#allocation2 + $0xe8] sm:$0xff]
          %v861 = vld [vmem:[#allocation2 + $0xf0] sm:$0xff]
          %v862 = vld [vmem:[#allocation2 + $0xf8] sm:$0xff]
          %863 = vst [vmem:[%s301] sm:$0xff] %v831
          %864 = vst [vmem:[%s301 + $0x8] sm:$0xff] %v832
          %865 = vst [vmem:[%s301 + $0x10] sm:$0xff] %v833
          %866 = vst [vmem:[%s301 + $0x18] sm:$0xff] %v834
          %867 = vst [vmem:[%s301 + $0x20] sm:$0xff] %v835
          %868 = vst [vmem:[%s301 + $0x28] sm:$0xff] %v836
          %869 = vst [vmem:[%s301 + $0x30] sm:$0xff] %v837
          %870 = vst [vmem:[%s301 + $0x38] sm:$0xff] %v838
          %871 = vst [vmem:[%s301 + $0x40] sm:$0xff] %v839
          %872 = vst [vmem:[%s301 + $0x48] sm:$0xff] %v840
          %873 = vst [vmem:[%s301 + $0x50] sm:$0xff] %v841
          %874 = vst [vmem:[%s301 + $0x58] sm:$0xff] %v842
          %875 = vst [vmem:[%s301 + $0x60] sm:$0xff] %v843
          %876 = vst [vmem:[%s301 + $0x68] sm:$0xff] %v844
          %877 = vst [vmem:[%s301 + $0x70] sm:$0xff] %v845
          %878 = vst [vmem:[%s301 + $0x78] sm:$0xff] %v846
          %879 = vst [vmem:[%s301 + $0x80] sm:$0xff] %v847
          %880 = vst [vmem:[%s301 + $0x88] sm:$0xff] %v848
          %881 = vst [vmem:[%s301 + $0x90] sm:$0xff] %v849
          %882 = vst [vmem:[%s301 + $0x98] sm:$0xff] %v850
          %883 = vst [vmem:[%s301 + $0xa0] sm:$0xff] %v851
          %884 = vst [vmem:[%s301 + $0xa8] sm:$0xff] %v852
          %885 = vst [vmem:[%s301 + $0xb0] sm:$0xff] %v853
          %886 = vst [vmem:[%s301 + $0xb8] sm:$0xff] %v854
          %887 = vst [vmem:[%s301 + $0xc0] sm:$0xff] %v855
          %888 = vst [vmem:[%s301 + $0xc8] sm:$0xff] %v856
          %889 = vst [vmem:[%s301 + $0xd0] sm:$0xff] %v857
          %890 = vst [vmem:[%s301 + $0xd8] sm:$0xff] %v858
          %891 = vst [vmem:[%s301 + $0xe0] sm:$0xff] %v859
          %892 = vst [vmem:[%s301 + $0xe8] sm:$0xff] %v860
          %893 = vst [vmem:[%s301 + $0xf0] sm:$0xff] %v861
          %894 = vst [vmem:[%s301 + $0xf8] sm:$0xff] %v862
        $region52: #{tpu_custom_call.1} parent=31 // pred_fallthru
          _
        %s895 = sand.u32 %s136, 1
        %s896 = scalar_lea.sflag [#allocation5], %s895
        %s897 = sand.u32 %s136, 1
        %s898 = smul.addr %s897, 256
        %s899 = scalar_lea.vmem [#allocation9], %s898
        // Predicated region
        $region53: #{tpu_custom_call.1} parent=31 // pred_check
          %p900 = pneg %p146
        $region54: #{tpu_custom_call.1} parent=31 // pred_check_branch
          %902 = sbr.rel (%p900) target = $region56
        $region55: #{tpu_custom_call.1} parent=31 // pred_region
          %s903 = smul.u32 16, %s28
          %s904 = smul.u32 2, %s29
          %s906 = ssub.s32 4096, 4096
          %907 = vsyncadd %s896, %s906
          %s908 = smul.addr %s903, 4
          %s909 = sadd.s32 %s904, %s908
          %s910 = smul.addr %s909, 128
          %s911 = scalar_lea.hbm %s3, %s910
          %s912 = sshll.u32 %s899, 4
          %s913 = int_to_ptr.vmem [resolvable:$true] %s912
          %918 = dma.vmem_to_hbm [thread:$0]  %s913, 4096, %s911, %s896, 256, 512, 16
        $region56: #{tpu_custom_call.1} parent=31 // pred_fallthru
          _
      $region32: #{tpu_custom_call.1} parent=5 // pred_fallthru
        _
      %p919 = scmp.le.s32.totalorder 2, %s18
      // Predicated region
      $region57: #{tpu_custom_call.1} parent=5 // pred_check
        %p920 = pneg %p919
      $region58: #{tpu_custom_call.1} parent=5 // pred_check_branch
        %922 = sbr.rel (%p920) target = $region60
      $region59: #{tpu_custom_call.1} parent=5 // pred_region
        %s923 = ssub.s32 %s18, 2
        // Predicated region
        $region61: #{tpu_custom_call.1} parent=59 // pred_check
          %p924 = pneg %p152
        $region62: #{tpu_custom_call.1} parent=59 // pred_check_branch
          %926 = sbr.rel (%p924) target = $region64
        $region63: #{tpu_custom_call.1} parent=59 // pred_region
          %s927 = sand.u32 %s137, 1
          %s928 = scalar_lea.sflag [#allocation5], %s927
          %s929 = sand.u32 %s137, 1
          %s930 = smul.addr %s929, 256
          %s931 = scalar_lea.vmem [#allocation9], %s930
          %932 = dma.done %s928, 4096
        $region64: #{tpu_custom_call.1} parent=59 // pred_fallthru
          _
      $region60: #{tpu_custom_call.1} parent=5 // pred_fallthru
        _
    $region6: #{tpu_custom_call.1} parent=1 // loop_footer
      %s22 = sadd.s32 1, %s18
    $region7: #{tpu_custom_call.1} parent=1 // loop_footer_branch
      %17 = sbr.rel target = $region3
    $region8: #{tpu_custom_call.1} parent=1 // loop_exit
      _
    %933 = vsyncpa [#allocation4], 1
    %s934 = scalar_lea.sflag [#allocation4], 1
    %935 = vsyncpa %s934, 1
    %936 = vsyncpa [#allocation7], 1
    %s937 = scalar_lea.sflag [#allocation7], 1
    %938 = vsyncpa %s937, 1
    %939 = vsyncpa [#allocation5], 1
    %s940 = scalar_lea.sflag [#allocation5], 1
    %941 = vsyncpa %s940, 1

</llo_original>
